<compile_context>
chip_gen: v5e
topology: v5e:2x2
jax: 0.10.0
libtpu: 0.0.40
codegen_flags: <defaults>
</compile_context>

<pallas_src>
import jax
import jax.numpy as jnp
from jax.experimental import pallas as pl
from jax.experimental.pallas import tpu as pltpu

HIDDEN_W = 20
ENV_SIZE = 9
INPUT_W = ENV_SIZE + 1          # 10
IN_DIM = INPUT_W + HIDDEN_W     # 30 (fc1 input)

LANE = 128                      # TPU lane width
MAX_TB = 512                    # lane-columns per grid step (multiple of 128)


def _dynamic_net_kernel(x_ref, w1_ref, b1_ref, w2_ref, b2_ref, o_ref):
    # x_ref : (30, TB)  bf16     w1_ref: (20, 30) bf16   b1_ref: (20, 1) f32
    # w2_ref: (20, 20)  bf16     b2_ref: (20, 1)  f32    o_ref : (20, TB) f32
    x = x_ref[...]
    # fc1: f32 accumulation on the MXU, bias broadcast over the lane (batch) axis.
    h = jnp.dot(w1_ref[...], x, preferred_element_type=jnp.float32) + b1_ref[...]
    h = jnp.maximum(h, 0.0)                                  # F.relu
    # fc2
    y = jnp.dot(w2_ref[...], h.astype(w2_ref.dtype),
                preferred_element_type=jnp.float32) + b2_ref[...]
    o_ref[...] = y.astype(o_ref.dtype)


def dynamic_net_forward(x, w1, b1, w2, b2):
    """DynamicNet forward.

    x : (B, 30) float  — batch-major, PyTorch convention.
    w1: (20, 30), b1: (20,)   (PyTorch Linear weight layout: (out, in))
    w2: (20, 20), b2: (20,)
    Returns (B, 20) float32.
    """
    B = x.shape[0]

    # ---- layout plumbing: feature-major, batch on the 128-lane axis ----
    padded = pl.cdiv(B, LANE) * LANE
    tb = min(MAX_TB, padded)
    padded = pl.cdiv(padded, tb) * tb          # last tile fully in-bounds
    grid = (padded // tb,)

    x_fm = jnp.zeros((IN_DIM, padded), jnp.bfloat16)
    x_fm = x_fm.at[:, :B].set(jnp.transpose(x).astype(jnp.bfloat16))

    w1_bf = w1.astype(jnp.bfloat16)            # (20, 30)
    w2_bf = w2.astype(jnp.bfloat16)            # (20, 20)
    b1_col = b1.reshape(HIDDEN_W, 1).astype(jnp.float32)
    b2_col = b2.reshape(HIDDEN_W, 1).astype(jnp.float32)

    y_fm = pl.pallas_call(
        _dynamic_net_kernel,
        out_shape=jax.ShapeDtypeStruct((HIDDEN_W, padded), jnp.float32),
        grid=grid,
        in_specs=[
            pl.BlockSpec((IN_DIM, tb), lambda i: (0, i)),          # x tile
            pl.BlockSpec((HIDDEN_W, IN_DIM), lambda i: (0, 0)),    # w1 resident
            pl.BlockSpec((HIDDEN_W, 1), lambda i: (0, 0)),         # b1 resident
            pl.BlockSpec((HIDDEN_W, HIDDEN_W), lambda i: (0, 0)),  # w2 resident
            pl.BlockSpec((HIDDEN_W, 1), lambda i: (0, 0)),         # b2 resident
        ],
        out_specs=pl.BlockSpec((HIDDEN_W, tb), lambda i: (0, i)),
        compiler_params=pltpu.CompilerParams(
            dimension_semantics=("parallel",)),
    )(x_fm, w1_bf, b1_col, w2_bf, b2_col)

    # back to batch-major, drop the padding
    return jnp.transpose(y_fm[:, :B])


def init_params(key):
    """Deterministic init matching nn.Linear (weights stored (out, in))."""
    k1, k2, k3, k4 = jax.random.split(key, 4)
    bound1 = 1.0 / jnp.sqrt(IN_DIM)
    bound2 = 1.0 / jnp.sqrt(HIDDEN_W)
    w1 = jax.random.uniform(k1, (HIDDEN_W, IN_DIM), jnp.float32, -bound1, bound1)
    b1 = jax.random.uniform(k2, (HIDDEN_W,), jnp.float32, -bound1, bound1)
    w2 = jax.random.uniform(k3, (HIDDEN_W, HIDDEN_W), jnp.float32, -bound2, bound2)
    b2 = jax.random.uniform(k4, (HIDDEN_W,), jnp.float32, -bound2, bound2)
    return w1, b1, w2, b2


if __name__ == "__main__":
    key = jax.random.PRNGKey(0)
    kx, kp = jax.random.split(key)

    batch = 8
    x = jax.random.normal(kx, (batch, IN_DIM), jnp.float32)
    w1, b1, w2, b2 = init_params(kp)

    out = dynamic_net_forward(x, w1, b1, w2, b2)
    out = jax.block_until_ready(out)

    # Pure-JAX reference with the same bf16 input/weight rounding as the kernel.
    x_r = x.astype(jnp.bfloat16).astype(jnp.float32)
    w1_r = w1.astype(jnp.bfloat16).astype(jnp.float32)
    w2_r = w2.astype(jnp.bfloat16).astype(jnp.float32)
    h_ref = jnp.maximum(x_r @ w1_r.T + b1, 0.0)
    h_ref = h_ref.astype(jnp.bfloat16).astype(jnp.float32)
    ref = h_ref @ w2_r.T + b2

    assert out.shape == (batch, HIDDEN_W)
    assert jnp.allclose(out, ref, atol=1e-2, rtol=1e-2)

    print("KERNEL_OK")
</pallas_src>

<mosaic_0001>
module attributes {stable_mosaic.version = 11 : i64} {
  func.func @_dynamic_net_kernel(%arg0: i32, %arg1: memref<30x128xbf16, #tpu.memory_space<vmem>>, %arg2: memref<20x30xbf16, #tpu.memory_space<vmem>>, %arg3: memref<20x1xf32, #tpu.memory_space<vmem>>, %arg4: memref<20x20xbf16, #tpu.memory_space<vmem>>, %arg5: memref<20x1xf32, #tpu.memory_space<vmem>>, %arg6: memref<20x128xf32, #tpu.memory_space<vmem>>) attributes {dimension_semantics = [#tpu.dimension_semantics<parallel>], iteration_bounds = array<i64: 1>, scalar_prefetch = 0 : i64, scratch_operands = 0 : i64, tpu.core_type = #tpu.core_type<tc>, window_params = [{transform_indices = @transform_0, window_bounds = array<i64: 30, 128>}, {pipeline_mode = #tpu.pipeline_mode<synchronous>, transform_indices = @transform_1, window_bounds = array<i64: 20, 30>}, {pipeline_mode = #tpu.pipeline_mode<synchronous>, transform_indices = @transform_2, window_bounds = array<i64: 20, 1>}, {pipeline_mode = #tpu.pipeline_mode<synchronous>, transform_indices = @transform_3, window_bounds = array<i64: 20, 20>}, {pipeline_mode = #tpu.pipeline_mode<synchronous>, transform_indices = @transform_4, window_bounds = array<i64: 20, 1>}, {transform_indices = @transform_5, window_bounds = array<i64: 20, 128>}]} {
    %c0 = arith.constant 0 : index
    %c0_0 = arith.constant 0 : index
    %0 = vector.load %arg1[%c0, %c0_0] : memref<30x128xbf16, #tpu.memory_space<vmem>>, vector<30x128xbf16>
    %c0_1 = arith.constant 0 : index
    %c0_2 = arith.constant 0 : index
    %1 = vector.load %arg2[%c0_1, %c0_2] : memref<20x30xbf16, #tpu.memory_space<vmem>>, vector<20x30xbf16>
    %cst = arith.constant dense<0.000000e+00> : vector<20x128xf32>
    %2 = tpu.matmul %1, %0, %cst {dimension_numbers = #tpu.dot_dimension_numbers<[1], [0], [0], [1], [0, 0, 1, 1], [], []>} : vector<20x30xbf16>, vector<30x128xbf16>, vector<20x128xf32> -> vector<20x128xf32>
    %c0_3 = arith.constant 0 : index
    %c0_4 = arith.constant 0 : index
    %3 = vector.load %arg3[%c0_3, %c0_4] : memref<20x1xf32, #tpu.memory_space<vmem>>, vector<20x1xf32>
    %4 = vector.broadcast %3 : vector<20x1xf32> to vector<20x128xf32>
    %5 = arith.addf %2, %4 : vector<20x128xf32>
    %cst_5 = arith.constant 0.000000e+00 : f32
    %6 = vector.broadcast %cst_5 : f32 to vector<20x128xf32>
    %7 = arith.maximumf %5, %6 : vector<20x128xf32>
    %c0_6 = arith.constant 0 : index
    %c0_7 = arith.constant 0 : index
    %8 = vector.load %arg4[%c0_6, %c0_7] : memref<20x20xbf16, #tpu.memory_space<vmem>>, vector<20x20xbf16>
    %9 = arith.truncf %7 : vector<20x128xf32> to vector<20x128xbf16>
    %cst_8 = arith.constant dense<0.000000e+00> : vector<20x128xf32>
    %10 = tpu.matmul %8, %9, %cst_8 {dimension_numbers = #tpu.dot_dimension_numbers<[1], [0], [0], [1], [0, 0, 1, 1], [], []>} : vector<20x20xbf16>, vector<20x128xbf16>, vector<20x128xf32> -> vector<20x128xf32>
    %c0_9 = arith.constant 0 : index
    %c0_10 = arith.constant 0 : index
    %11 = vector.load %arg5[%c0_9, %c0_10] : memref<20x1xf32, #tpu.memory_space<vmem>>, vector<20x1xf32>
    %12 = vector.broadcast %11 : vector<20x1xf32> to vector<20x128xf32>
    %13 = arith.addf %10, %12 : vector<20x128xf32>
    %c0_11 = arith.constant 0 : index
    %c0_12 = arith.constant 0 : index
    %14 = vector.load %arg6[%c0_11, %c0_12] : memref<20x128xf32, #tpu.memory_space<vmem>>, vector<20x128xf32>
    tpu.vector_store %arg6[%c0_11, %c0_12], %13 {strides = array<i32>} : memref<20x128xf32, #tpu.memory_space<vmem>>, vector<20x128xf32>,
    return
  }
  func.func @transform_0(%arg0: i32) -> (i32, i32) {
    %c0_i32 = arith.constant 0 : i32
    %c0_i32_0 = arith.constant 0 : i32
    return %c0_i32, %arg0 : i32, i32
  }
  func.func @transform_1(%arg0: i32) -> (i32, i32) {
    %c0_i32 = arith.constant 0 : i32
    %c0_i32_0 = arith.constant 0 : i32
    %c0_i32_1 = arith.constant 0 : i32
    return %c0_i32, %c0_i32_0 : i32, i32
  }
  func.func @transform_2(%arg0: i32) -> (i32, i32) {
    %c0_i32 = arith.constant 0 : i32
    %c0_i32_0 = arith.constant 0 : i32
    %c0_i32_1 = arith.constant 0 : i32
    return %c0_i32, %c0_i32_0 : i32, i32
  }
  func.func @transform_3(%arg0: i32) -> (i32, i32) {
    %c0_i32 = arith.constant 0 : i32
    %c0_i32_0 = arith.constant 0 : i32
    %c0_i32_1 = arith.constant 0 : i32
    return %c0_i32, %c0_i32_0 : i32, i32
  }
  func.func @transform_4(%arg0: i32) -> (i32, i32) {
    %c0_i32 = arith.constant 0 : i32
    %c0_i32_0 = arith.constant 0 : i32
    %c0_i32_1 = arith.constant 0 : i32
    return %c0_i32, %c0_i32_0 : i32, i32
  }
  func.func @transform_5(%arg0: i32) -> (i32, i32) {
    %c0_i32 = arith.constant 0 : i32
    %c0_i32_0 = arith.constant 0 : i32
    return %c0_i32, %arg0 : i32, i32
  }
}

</mosaic_0001>

<llo_original>
// kernel: tpu_custom_call.1
$region0: #{tpu_custom_call.1}
  #allocation0 [shape = 'u32[]', space=smem, size = 0x4, offset = 0x4, fixed_abs, tag = 'smem constant byte address 0x4 - core index']
  #allocation1 [shape = 'u32[72,128]{1,0:T(1,128)}', space=vmem, size = 0x9000, scoped, tag = 'internal scratch']
  %s0 = inlined_call_operand.vmem [shape: bf16[30,128], index: 0, kind: input, shape index: {}]
  %s1 = inlined_call_operand.vmem [shape: bf16[20,30], index: 1, kind: input, shape index: {}]
  %s2 = inlined_call_operand.vmem [shape: f32[20,1], index: 2, kind: input, shape index: {}]
  %s3 = inlined_call_operand.vmem [shape: bf16[20,20], index: 3, kind: input, shape index: {}]
  %s4 = inlined_call_operand.vmem [shape: f32[20,1], index: 4, kind: input, shape index: {}]
  %s5 = inlined_call_operand.hbm [shape: f32[20,128], index: 5, kind: output, shape index: {}]
  %s6 = sld [smem:[#allocation0]]
  $region30: #{tpu_custom_call.1} parent=0
    _
  %s8 = ssub.s32 1, %s6
  %s9 = scalar_select 0, %s8, %s6
  $region1: #{tpu_custom_call.1} parent=0
    #allocation2 [shape = 'u8[12288]{0}', space=vmem, size = 0x3000, scoped, tag = 'output window, operand 0, single buffered']
    #allocation3 [shape = 's32[1]{0}', space=sflag, size = 0x4, scoped, tag = 'scoped memory for tpu_custom_call.1']
    %10 = vsyncpa [#allocation3], 0
    // Predicated region
    $region2: #{tpu_custom_call.1} parent=1 // pred_check
      _
    $region3: #{tpu_custom_call.1} parent=1 // pred_check_branch
      %12 = sbr.rel (0) target = $region5
    $region4: #{tpu_custom_call.1} parent=1 // pred_region
      _
    $region5: #{tpu_custom_call.1} parent=1 // pred_fallthru
      _
    // Predicated region
    $region6: #{tpu_custom_call.1} parent=1 // pred_check
      _
    $region7: #{tpu_custom_call.1} parent=1 // pred_check_branch
      %14 = sbr.rel (0) target = $region9
    $region8: #{tpu_custom_call.1} parent=1 // pred_region
      _
    $region9: #{tpu_custom_call.1} parent=1 // pred_fallthru
      _
    // Predicated region
    $region10: #{tpu_custom_call.1} parent=1 // pred_check
      _
    $region11: #{tpu_custom_call.1} parent=1 // pred_check_branch
      %16 = sbr.rel (0) target = $region13
    $region12: #{tpu_custom_call.1} parent=1 // pred_region
      _
    $region13: #{tpu_custom_call.1} parent=1 // pred_fallthru
      _
    // Predicated region
    $region14: #{tpu_custom_call.1} parent=1 // pred_check
      _
    $region15: #{tpu_custom_call.1} parent=1 // pred_check_branch
      %18 = sbr.rel (0) target = $region17
    $region16: #{tpu_custom_call.1} parent=1 // pred_region
      _
    $region17: #{tpu_custom_call.1} parent=1 // pred_fallthru
      _
    // Predicated region
    $region18: #{tpu_custom_call.1} parent=1 // pred_check
      _
    $region19: #{tpu_custom_call.1} parent=1 // pred_check_branch
      %20 = sbr.rel (0) target = $region21
    $region20: #{tpu_custom_call.1} parent=1 // pred_region
      _
    $region21: #{tpu_custom_call.1} parent=1 // pred_fallthru
      _
    %v22 = vld [vmem:[%s0] sm:$0xf]
    %v23 = vld [vmem:[%s0 + $0x4] sm:$0xf]
    %v24 = vld [vmem:[%s0 + $0x8] sm:$0xf]
    %v25 = vld [vmem:[%s0 + $0xc] sm:$0x7]
    %v26 = vld [vmem:[%s1] sm:$0xf]
    %v27 = vld [vmem:[%s1 + $0x4] sm:$0xf]
    %v28 = vld [vmem:[%s1 + $0x8] sm:$0x3]
    %v29 = vld [vmem:[%s2] sm:$0xff]
    %v30 = vld [vmem:[%s2 + $0x8] sm:$0xff]
    %v31 = vld [vmem:[%s2 + $0x10] sm:$0xf]
    %33 = vset.pattern.permute.xlu0 0
    %34 = vperm.xlu0 %33, %v29
    %v35 = vpop.permute.xlu0 %34
    %38 = vset.pattern.permute.xlu0 0
    %39 = vperm.xlu0 %38, %v30
    %v40 = vpop.permute.xlu0 %39
    %43 = vset.pattern.permute.xlu0 0
    %44 = vperm.xlu0 %43, %v31
    %v45 = vpop.permute.xlu0 %44
    %v50 = vunpack.c.l.b16 %v26
    %v51 = vunpack.c.l.b16 %v27
    %v52 = vunpack.c.l.b16 %v28
    %v53 = vpack.c.b16 %v51, %v50
    %v54 = vpack.c.b16 %v52, %v52
    %v59 = vunpack.c.l.b16 %v22
    %v60 = vunpack.c.l.b16 %v23
    %v61 = vunpack.c.l.b16 %v24
    %v62 = vunpack.c.l.b16 %v25
    %v63 = vpack.c.b16 %v60, %v59
    %v64 = vpack.c.b16 %v62, %v61
    %vm66 = vcmask 244736
    %v68 = vsel %vm66, %v53, 0
    %v71 = vsel %vm66, %v54, 0
    %vm73 = vcmask 1046528
    %v75 = vsel %vm73, %v64, 0
    %77 = vmatpush.bf16.msra.mxu0 0
    %78 = vmatpush.bf16.msra.mxu0 0
    %79 = vmatpush.bf16.msra.mxu0 0
    %80 = vmatpush.bf16.msra.mxu0 0
    %81 = vmatpush.bf16.msra.mxu0 0
    %82 = vmatpush.bf16.msra.mxu0 0
    %83 = vmatpush.bf16.msra.mxu0 %v75
    %84 = vmatpush.bf16.msra.mxu0 %v63
    %85 = vmatmul.bf16.gmra.mxu0 %v68
    %v86 = vpop.f32.mrf.mxu0
    %v87 = vadd.f32 %v35, %v86
    %v88 = vpop.f32.mrf.mxu0
    %v89 = vadd.f32 %v40, %v88
    %90 = vmatmul.bf16.gmra.mxu0 %v71
    %v91 = vpop.f32.mrf.mxu0
    %v92 = vadd.f32 %v45, %v91
    %v93 = vpop.f32.mrf.mxu0
    %94 = vdwg.mxu0
    %v95 = vmax.f32 %v87, 0.0
    %v96 = vmax.f32 %v89, 0.0
    %v97 = vmax.f32 %v92, 0.0
    %v98 = vld [vmem:[%s3] sm:$0xf]
    %v99 = vld [vmem:[%s3 + $0x4] sm:$0xf]
    %v100 = vld [vmem:[%s3 + $0x8] sm:$0x3]
    %v101 = vpack.c.bf16 %v96, %v95
    %v102 = vpack.c.bf16 %v97, %v97
    %v103 = vld [vmem:[%s4] sm:$0xff]
    %v104 = vld [vmem:[%s4 + $0x8] sm:$0xff]
    %v105 = vld [vmem:[%s4 + $0x10] sm:$0xf]
    %107 = vset.pattern.permute.xlu0 0
    %108 = vperm.xlu0 %107, %v103
    %v109 = vpop.permute.xlu0 %108
    %112 = vset.pattern.permute.xlu0 0
    %113 = vperm.xlu0 %112, %v104
    %v114 = vpop.permute.xlu0 %113
    %117 = vset.pattern.permute.xlu0 0
    %118 = vperm.xlu0 %117, %v105
    %v119 = vpop.permute.xlu0 %118
    %v124 = vunpack.c.l.b16 %v98
    %v125 = vunpack.c.l.b16 %v99
    %v126 = vunpack.c.l.b16 %v100
    %v127 = vpack.c.b16 %v125, %v124
    %v128 = vpack.c.b16 %v126, %v126
    %vm129 = vcmask 162816
    %v131 = vsel %vm129, %v127, 0
    %v134 = vsel %vm129, %v128, 0
    %vm136 = vcmask 1041408
    %v138 = vsel %vm136, %v102, 0
    %140 = vmatpush.bf16.msra.mxu0 0
    %141 = vmatpush.bf16.msra.mxu0 0
    %142 = vmatpush.bf16.msra.mxu0 0
    %143 = vmatpush.bf16.msra.mxu0 0
    %144 = vmatpush.bf16.msra.mxu0 0
    %145 = vmatpush.bf16.msra.mxu0 0
    %146 = vmatpush.bf16.msra.mxu0 %v138
    %147 = vmatpush.bf16.msra.mxu0 %v101
    %148 = vmatmul.bf16.gmra.mxu0 %v131
    %v149 = vpop.f32.mrf.mxu0
    %v150 = vadd.f32 %v109, %v149
    %v151 = vpop.f32.mrf.mxu0
    %v152 = vadd.f32 %v114, %v151
    %153 = vmatmul.bf16.gmra.mxu0 %v134
    %v154 = vpop.f32.mrf.mxu0
    %v155 = vadd.f32 %v119, %v154
    %v156 = vpop.f32.mrf.mxu0
    %157 = vdwg.mxu0
    %158 = vst [vmem:[#allocation2] sm:$0xff] %v150
    %159 = vst [vmem:[#allocation2 + $0x8] sm:$0xff] %v152
    %160 = vst [vmem:[#allocation2 + $0x10] sm:$0xf] %v155
    // Predicated region
    $region22: #{tpu_custom_call.1} parent=1 // pred_check
      _
    $region23: #{tpu_custom_call.1} parent=1 // pred_check_branch
      %162 = sbr.rel (0) target = $region25
    $region24: #{tpu_custom_call.1} parent=1 // pred_region
      %164 = vsyncadd [#allocation3], 0
      %s165 = sshll.u32 [#allocation2], 4
      %s166 = int_to_ptr.vmem [resolvable:$true] %s165
      %s167 = sshll.u32 %s5, 4
      %s168 = int_to_ptr.hbm [resolvable:$true] %s167
      %173 = dma.vmem_to_hbm [thread:$0]  %s166, 384, %s168, [#allocation3], 128, 128, 8
    $region25: #{tpu_custom_call.1} parent=1 // pred_fallthru
      _
    // Predicated region
    $region26: #{tpu_custom_call.1} parent=1 // pred_check
      _
    $region27: #{tpu_custom_call.1} parent=1 // pred_check_branch
      %175 = sbr.rel (0) target = $region29
    $region28: #{tpu_custom_call.1} parent=1 // pred_region
      %177 = dma.done [#allocation3], 384
    $region29: #{tpu_custom_call.1} parent=1 // pred_fallthru
      _
    %178 = vsyncpa [#allocation3], 1

</llo_original>
